<compile_context>
chip_gen: v7x
topology: tpu7x:2x2x1
jax: 0.10.0
libtpu: 0.0.40
codegen_flags: <defaults>
</compile_context>

<pallas_src>
import functools

import jax
import jax.numpy as jnp
from jax.experimental import pallas as pl
from jax.experimental.pallas import tpu as pltpu


# ----------------------------------------------------------------------------
# Kernel: pure VPU madd, lane-dense tiles.
# ----------------------------------------------------------------------------
def mh_proposal_kernel(z_ref, eps_ref, z_new_ref, *, scale):
    z_new_ref[...] = eps_ref[...] * scale + z_ref[...]


# ----------------------------------------------------------------------------
# Layout selection: flatten to (rows, lanes) with lanes a large multiple of
# 128 and rows a multiple of 8 (sublane tile).  Pad only if necessary.
# ----------------------------------------------------------------------------
_TILE_BYTES = 2 * 1024 * 1024  # ~2 MiB per array per tile; 3 arrays x 2 bufs = 12 MiB


def _choose_layout(n):
    # Prefer the largest lane width that tiles n exactly with sublane-aligned
    # rows (no padding copy needed); otherwise fall back to 512 lanes + pad.
    for lanes in (4096, 2048, 1024, 512, 256, 128):
        if n % lanes == 0 and (n // lanes) % 8 == 0:
            return lanes, n // lanes
    lanes = 512
    rows = ((pl.cdiv(n, lanes) + 7) // 8) * 8
    return lanes, rows


def mh_proposal_forward(z, eps, scale):
    """z, eps: same shape, float32; scale: python float.

    Returns (z_new, log_p_diff) with z_new.shape == z.shape and
    log_p_diff.shape == (z.shape[0],) (identically zero: symmetric proposal).
    """
    orig_shape = z.shape
    batch = orig_shape[0]
    dtype = z.dtype
    n = z.size

    lanes, rows = _choose_layout(n)

    # Tile rows: multiple of 8, <= rows, tile bytes <= _TILE_BYTES.
    tb = max(8, min(rows, (_TILE_BYTES // (lanes * 4)) // 8 * 8))
    rows_pad = pl.cdiv(rows, tb) * tb
    n_pad = rows_pad * lanes

    z_flat = z.reshape(-1)
    eps_flat = eps.reshape(-1)
    if n_pad != n:
        z_flat = jnp.pad(z_flat, (0, n_pad - n))
        eps_flat = jnp.pad(eps_flat, (0, n_pad - n))
    z2 = z_flat.reshape(rows_pad, lanes)
    eps2 = eps_flat.reshape(rows_pad, lanes)

    grid = (rows_pad // tb,)
    kernel = functools.partial(mh_proposal_kernel, scale=float(scale))

    z_new2 = pl.pallas_call(
        kernel,
        grid=grid,
        in_specs=[
            pl.BlockSpec((tb, lanes), lambda i: (i, 0)),  # z
            pl.BlockSpec((tb, lanes), lambda i: (i, 0)),  # eps
        ],
        out_specs=pl.BlockSpec((tb, lanes), lambda i: (i, 0)),  # z_new
        out_shape=jax.ShapeDtypeStruct((rows_pad, lanes), dtype),
        compiler_params=pltpu.CompilerParams(
            dimension_semantics=("parallel",),
            vmem_limit_bytes=32 * 1024 * 1024,
        ),
    )(z2, eps2)

    z_new = z_new2.reshape(-1)[:n].reshape(orig_shape)

    # Symmetric proposal: log p(z | z_new) - log p(z_new | z) == 0 exactly.
    log_p_diff = jnp.zeros((batch,), dtype)
    return z_new, log_p_diff


if __name__ == "__main__":
    # Small shapes consistent with the module: batch=2, event shape (4, 16, 16)
    B = 2
    event_shape = (4, 16, 16)  # (C, H, W)
    scale = 0.1                # deterministic "parameter" of the proposal

    key = jax.random.PRNGKey(0)
    kz, keps = jax.random.split(key)
    z = jax.random.normal(kz, (B,) + event_shape, dtype=jnp.float32)
    eps = jax.random.normal(keps, (B,) + event_shape, dtype=jnp.float32)

    z_new, log_p_diff = mh_proposal_forward(z, eps, scale)
    jax.block_until_ready((z_new, log_p_diff))

    # Reference check in plain JAX
    z_new_ref = eps * scale + z
    assert z_new.shape == (B,) + event_shape
    assert log_p_diff.shape == (B,)
    assert jnp.allclose(z_new, z_new_ref, atol=1e-6)
    # Symmetric proposal -> log probability ratio is exactly zero
    assert jnp.allclose(log_p_diff, jnp.zeros((B,), jnp.float32))

    print("KERNEL_OK")
</pallas_src>

<mosaic_0001>
module attributes {stable_mosaic.version = 11 : i64} {
  func.func @mh_proposal_kernel(%arg0: i32, %arg1: memref<8x256xf32, #tpu.memory_space<vmem>>, %arg2: memref<8x256xf32, #tpu.memory_space<vmem>>, %arg3: memref<8x256xf32, #tpu.memory_space<vmem>>) attributes {dimension_semantics = [#tpu.dimension_semantics<parallel>], iteration_bounds = array<i64: 1>, scalar_prefetch = 0 : i64, scratch_operands = 0 : i64, tpu.core_type = #tpu.core_type<tc>, window_params = [{transform_indices = @transform_0, window_bounds = array<i64: 8, 256>}, {transform_indices = @transform_1, window_bounds = array<i64: 8, 256>}, {transform_indices = @transform_2, window_bounds = array<i64: 8, 256>}]} {
    %c0 = arith.constant 0 : index
    %c0_0 = arith.constant 0 : index
    %0 = vector.load %arg2[%c0, %c0_0] : memref<8x256xf32, #tpu.memory_space<vmem>>, vector<8x256xf32>
    %cst = arith.constant 1.000000e-01 : f32
    %1 = vector.broadcast %cst : f32 to vector<8x256xf32>
    %2 = arith.mulf %0, %1 : vector<8x256xf32>
    %c0_1 = arith.constant 0 : index
    %c0_2 = arith.constant 0 : index
    %3 = vector.load %arg1[%c0_1, %c0_2] : memref<8x256xf32, #tpu.memory_space<vmem>>, vector<8x256xf32>
    %4 = arith.addf %2, %3 : vector<8x256xf32>
    %c0_3 = arith.constant 0 : index
    %c0_4 = arith.constant 0 : index
    %5 = vector.load %arg3[%c0_3, %c0_4] : memref<8x256xf32, #tpu.memory_space<vmem>>, vector<8x256xf32>
    tpu.vector_store %arg3[%c0_3, %c0_4], %4 {strides = array<i32>} : memref<8x256xf32, #tpu.memory_space<vmem>>, vector<8x256xf32>,
    return
  }
  func.func @transform_0(%arg0: i32) -> (i32, i32) {
    %c0_i32 = arith.constant 0 : i32
    %c0_i32_0 = arith.constant 0 : i32
    return %arg0, %c0_i32 : i32, i32
  }
  func.func @transform_1(%arg0: i32) -> (i32, i32) {
    %c0_i32 = arith.constant 0 : i32
    %c0_i32_0 = arith.constant 0 : i32
    return %arg0, %c0_i32 : i32, i32
  }
  func.func @transform_2(%arg0: i32) -> (i32, i32) {
    %c0_i32 = arith.constant 0 : i32
    %c0_i32_0 = arith.constant 0 : i32
    return %arg0, %c0_i32 : i32, i32
  }
}

</mosaic_0001>

<llo_original>
// kernel: tpu_custom_call.1
$region0: #{tpu_custom_call.1}
  #allocation0 [shape = 'u32[]', space=smem, size = 0x4, offset = 0x4, fixed_abs, tag = 'smem constant byte address 0x4 - core index']
  #allocation1 [shape = 'u32[144,128]{1,0:T(1,128)}', space=vmem, size = 0x12000, scoped, tag = 'internal scratch']
  %s0 = inlined_call_operand.hbm [shape: f32[8,256], index: 0, kind: input, shape index: {}]
  %s1 = inlined_call_operand.hbm [shape: f32[8,256], index: 1, kind: input, shape index: {}]
  %s2 = inlined_call_operand.hbm [shape: f32[8,256], index: 2, kind: output, shape index: {}]
  %s3 = sld [smem:[#allocation0]]
  $region26: #{tpu_custom_call.1} parent=0
    _
  %s5 = ssub.s32 1, %s3
  %s6 = scalar_select 0, %s5, %s3
  $region1: #{tpu_custom_call.1} parent=0
    #allocation2 [shape = 'u8[8192]{0}', space=vmem, size = 0x2000, scoped, tag = 'input window, operand 0, single buffered']
    #allocation3 [shape = 's32[1]{0}', space=sflag, size = 0x4, scoped, tag = 'scoped memory for tpu_custom_call.1']
    #allocation4 [shape = 's32[1]{0}', space=sflag, size = 0x4, scoped, tag = 'scoped memory for tpu_custom_call.1']
    #allocation5 [shape = 'u8[8192]{0}', space=vmem, size = 0x2000, scoped, tag = 'input window, operand 1, single buffered']
    #allocation6 [shape = 's32[1]{0}', space=sflag, size = 0x4, scoped, tag = 'scoped memory for tpu_custom_call.1']
    #allocation7 [shape = 'u8[8192]{0}', space=vmem, size = 0x2000, scoped, tag = 'output window, operand 0, single buffered']
    %7 = vsyncpa [#allocation3], 0
    %8 = vsyncpa [#allocation6], 0
    %9 = vsyncpa [#allocation4], 0
    // Predicated region
    $region2: #{tpu_custom_call.1} parent=1 // pred_check
      _
    $region3: #{tpu_custom_call.1} parent=1 // pred_check_branch
      %11 = sbr.rel (0) target = $region5
    $region4: #{tpu_custom_call.1} parent=1 // pred_region
      %s13 = ssub.s32 256, 256
      %14 = vsyncadd [#allocation3], %s13
      %s16 = sshll.u32 [#allocation2], 4
      %s17 = int_to_ptr.vmem [resolvable:$true] %s16
      %19 = dma.hbm_to_vmem [thread:$0]  %s0, 256, %s17, [#allocation3]
    $region5: #{tpu_custom_call.1} parent=1 // pred_fallthru
      _
    // Predicated region
    $region6: #{tpu_custom_call.1} parent=1 // pred_check
      _
    $region7: #{tpu_custom_call.1} parent=1 // pred_check_branch
      %21 = sbr.rel (0) target = $region9
    $region8: #{tpu_custom_call.1} parent=1 // pred_region
      %s23 = ssub.s32 256, 256
      %24 = vsyncadd [#allocation6], %s23
      %s26 = sshll.u32 [#allocation5], 4
      %s27 = int_to_ptr.vmem [resolvable:$true] %s26
      %29 = dma.hbm_to_vmem [thread:$0]  %s1, 256, %s27, [#allocation6]
    $region9: #{tpu_custom_call.1} parent=1 // pred_fallthru
      _
    // Predicated region
    $region10: #{tpu_custom_call.1} parent=1 // pred_check
      _
    $region11: #{tpu_custom_call.1} parent=1 // pred_check_branch
      %31 = sbr.rel (0) target = $region13
    $region12: #{tpu_custom_call.1} parent=1 // pred_region
      %32 = dma.done [#allocation3], 256
    $region13: #{tpu_custom_call.1} parent=1 // pred_fallthru
      _
    // Predicated region
    $region14: #{tpu_custom_call.1} parent=1 // pred_check
      _
    $region15: #{tpu_custom_call.1} parent=1 // pred_check_branch
      %34 = sbr.rel (0) target = $region17
    $region16: #{tpu_custom_call.1} parent=1 // pred_region
      %35 = dma.done [#allocation6], 256
    $region17: #{tpu_custom_call.1} parent=1 // pred_fallthru
      _
    %v36 = vld [vmem:[#allocation5] sm:$0xff]
    %v37 = vld [vmem:[#allocation5 + $0x8] sm:$0xff]
    %v38 = vmul.f32 %v36, 0.1
    %v39 = vmul.f32 %v37, 0.1
    %v40 = vld [vmem:[#allocation2] sm:$0xff]
    %v41 = vld [vmem:[#allocation2 + $0x8] sm:$0xff]
    %v42 = vadd.f32 %v38, %v40
    %v43 = vadd.f32 %v39, %v41
    %44 = vst [vmem:[#allocation7] sm:$0xff] %v42
    %45 = vst [vmem:[#allocation7 + $0x8] sm:$0xff] %v43
    // Predicated region
    $region18: #{tpu_custom_call.1} parent=1 // pred_check
      _
    $region19: #{tpu_custom_call.1} parent=1 // pred_check_branch
      %47 = sbr.rel (0) target = $region21
    $region20: #{tpu_custom_call.1} parent=1 // pred_region
      %s49 = ssub.s32 256, 256
      %50 = vsyncadd [#allocation4], %s49
      %s52 = sshll.u32 [#allocation7], 4
      %s53 = int_to_ptr.vmem [resolvable:$true] %s52
      %55 = dma.vmem_to_hbm [thread:$0]  %s53, 256, %s2, [#allocation4]
    $region21: #{tpu_custom_call.1} parent=1 // pred_fallthru
      _
    // Predicated region
    $region22: #{tpu_custom_call.1} parent=1 // pred_check
      _
    $region23: #{tpu_custom_call.1} parent=1 // pred_check_branch
      %57 = sbr.rel (0) target = $region25
    $region24: #{tpu_custom_call.1} parent=1 // pred_region
      %58 = dma.done [#allocation4], 256
    $region25: #{tpu_custom_call.1} parent=1 // pred_fallthru
      _
    %59 = vsyncpa [#allocation3], 1
    %60 = vsyncpa [#allocation6], 1
    %61 = vsyncpa [#allocation4], 1

</llo_original>
